<compile_context>
chip_gen: v6e
topology: v6e:2x2x1
jax: 0.10.0
libtpu: 0.0.40
codegen_flags: <defaults>
</compile_context>

<pallas_src>
import jax
import jax.numpy as jnp
from jax.experimental import pallas as pl
from jax.experimental.pallas import tpu as pltpu

L2_EPS = 1e-12  # F.normalize clamps the norm at 1e-12


def _round_up(x, m):
    return ((x + m - 1) // m) * m


def _codebook_kernel(x_ref, embed_nt_ref, embed_ref, quant_ref, ind_ref):
    # x_ref        : (TN, D)  input dtype (f32 / bf16), one token tile
    # embed_nt_ref : (D, C)   bf16, l2-normalized codebook, pre-transposed (VMEM-resident)
    # embed_ref    : (C, D)   f32, un-normalized codebook (VMEM-resident)
    # quant_ref    : (TN, D)  f32, quantized output tile
    # ind_ref      : (1, TN)  i32, lane-dense code indices
    x = x_ref[...].astype(jnp.float32)

    # l2-normalize rows in f32 (F.normalize semantics), narrow to bf16 for the MXU.
    norm = jnp.sqrt(jnp.sum(x * x, axis=-1, keepdims=True))
    xn = (x / jnp.maximum(norm, L2_EPS)).astype(jnp.bfloat16)

    # Cosine-similarity logits: bf16 operands, f32 accumulation on the MXU.
    dist = jnp.dot(xn, embed_nt_ref[...], preferred_element_type=jnp.float32)  # (TN, C)

    tn, c = dist.shape
    m = jnp.max(dist, axis=-1, keepdims=True)                        # (TN, 1)
    lane = jax.lax.broadcasted_iota(jnp.int32, (tn, c), 1)           # (TN, C)
    # argmax with first-occurrence tie-breaking (matches torch.argmax).
    idx = jnp.min(jnp.where(dist == m, lane, jnp.int32(c)), axis=-1).astype(jnp.int32)  # (TN,)

    # Lane-dense index store.
    ind_ref[...] = idx[None, :]

    # Gather quantized vectors from the UN-normalized codebook via onehot @ embed.
    # Kept in f32 so the returned vectors equal codebook rows (exact for 0/1 onehot).
    onehot = (lane == idx[:, None]).astype(jnp.float32)              # (TN, C)
    quant_ref[...] = jnp.dot(onehot, embed_ref[...], preferred_element_type=jnp.float32)


def _codebook_call(x_flat, embed_nt, embed, tn):
    n_pad, d = x_flat.shape
    c, _ = embed.shape
    n_tiles = n_pad // tn
    quant, ind = pl.pallas_call(
        _codebook_kernel,
        out_shape=(
            jax.ShapeDtypeStruct((n_pad, d), jnp.float32),
            jax.ShapeDtypeStruct((1, n_pad), jnp.int32),
        ),
        grid_spec=pltpu.PrefetchScalarGridSpec(
            num_scalar_prefetch=0,
            grid=(n_tiles,),
            in_specs=[
                pl.BlockSpec((tn, d), lambda nn: (nn, 0)),   # token tile (pipelined)
                pl.BlockSpec((d, c), lambda nn: (0, 0)),     # normalized codebook (resident)
                pl.BlockSpec((c, d), lambda nn: (0, 0)),     # raw codebook (resident)
            ],
            out_specs=[
                pl.BlockSpec((tn, d), lambda nn: (nn, 0)),
                pl.BlockSpec((1, tn), lambda nn: (0, nn)),   # lane-dense indices
            ],
        ),
        compiler_params=pltpu.CompilerParams(
            dimension_semantics=("parallel",),
            vmem_limit_bytes=32 * 1024 * 1024,
        ),
    )(x_flat, embed_nt, embed)
    return quant, ind


def cosine_sim_codebook_forward(x, embed, *, tn=512):
    """Forward pass of CosineSimCodebook (eval semantics).

    x     : (b, n, d) or (h, b, n, d) array (any float dtype)
    embed : (h, c, d) codebook
    returns (quantize, embed_ind) mirroring the torch module.
    """
    needs_codebook_dim = x.ndim < 4
    if needs_codebook_dim:
        x = x[None]                                   # (1, b, n, d)
    h, b, n, d = x.shape
    N = b * n

    # Tile the token axis; TN is a multiple of 128 (lane-dense index output).
    tn_eff = min(tn, _round_up(N, 128))
    n_pad = _round_up(N, tn_eff)

    embed_f32 = embed.astype(jnp.float32)
    # Normalize the codebook ONCE in the wrapper (hoisted out of the tile loop),
    # pre-transpose and narrow to bf16 for the distance matmul.
    e_norm = jnp.sqrt(jnp.sum(embed_f32 * embed_f32, axis=-1, keepdims=True))
    embed_n = embed_f32 / jnp.maximum(e_norm, L2_EPS)
    embed_nt = jnp.swapaxes(embed_n, -1, -2).astype(jnp.bfloat16)    # (h, d, c)

    quants, inds = [], []
    for hh in range(h):
        xh = x[hh].reshape(N, d)                      # native dtype, cast in-kernel
        if n_pad != N:
            xh = jnp.pad(xh, ((0, n_pad - N), (0, 0)))
        q, i = _codebook_call(xh, embed_nt[hh], embed_f32[hh], tn_eff)
        quants.append(q[:N])
        inds.append(i[0, :N])

    quantize = jnp.stack(quants).reshape(h, b, n, d)
    embed_ind = jnp.stack(inds).reshape(h, b, n)
    if needs_codebook_dim:
        quantize, embed_ind = quantize[0], embed_ind[0]
    return quantize, embed_ind


def residual_vq_forward(x, codebooks, *, tn=512):
    """ResidualVQ-style forward (eval semantics, no losses): each quantizer
    quantizes the running residual; quantized outputs are summed."""
    residual = x.astype(jnp.float32)
    quantized_out = jnp.zeros_like(residual)
    indices = []
    for q in range(codebooks.shape[0]):
        quant, ind = cosine_sim_codebook_forward(residual, codebooks[q][None], tn=tn)
        residual = residual - quant
        quantized_out = quantized_out + quant
        indices.append(ind)
    return quantized_out, jnp.stack(indices, axis=-1)


def init_codebook(key, num_codebooks, codebook_size, dim):
    # Deterministic stand-in for l2norm(kaiming_uniform_(empty(h, c, d))).
    bound = (6.0 / dim) ** 0.5
    e = jax.random.uniform(
        key, (num_codebooks, codebook_size, dim),
        minval=-bound, maxval=bound, dtype=jnp.float32)
    e = e / jnp.maximum(
        jnp.sqrt(jnp.sum(e * e, axis=-1, keepdims=True)), L2_EPS)
    return e


if __name__ == "__main__":
    key = jax.random.PRNGKey(0)
    k_x, k_e1, k_e2 = jax.random.split(key, 3)

    # Small shapes consistent with the module's expected inputs.
    num_codebooks = 1
    codebook_size = 64     # num_tokens (small demo value)
    dim = 32               # codebook_dim (small demo value)
    batch, seq = 2, 8

    x = jax.random.normal(k_x, (batch, seq, dim), dtype=jnp.float32)
    embed = init_codebook(k_e1, num_codebooks, codebook_size, dim)

    quantize, embed_ind = cosine_sim_codebook_forward(x, embed)
    quantize = jax.block_until_ready(quantize)
    embed_ind = jax.block_until_ready(embed_ind)

    # Reference check in plain JAX, matching the kernel's numerics
    # (bf16 normalized operands, f32 accumulation).
    xf = x.astype(jnp.float32).reshape(batch * seq, dim)
    xn = (xf / jnp.maximum(
        jnp.sqrt(jnp.sum(xf * xf, axis=-1, keepdims=True)), L2_EPS)).astype(jnp.bfloat16)
    e0 = embed[0]
    en = (e0 / jnp.maximum(
        jnp.sqrt(jnp.sum(e0 * e0, axis=-1, keepdims=True)), L2_EPS)).astype(jnp.bfloat16)
    dist = jnp.dot(xn, en.T, preferred_element_type=jnp.float32)
    ref_ind = jnp.argmax(dist, axis=-1).astype(jnp.int32)
    ref_quant = jnp.take(e0, ref_ind, axis=0)

    assert quantize.shape == (batch, seq, dim)
    assert embed_ind.shape == (batch, seq)
    assert jnp.array_equal(embed_ind.reshape(-1), ref_ind)
    assert jnp.allclose(quantize.reshape(-1, dim), ref_quant, atol=1e-5, rtol=1e-5)

    # Residual-VQ demo (num_quantizers=2, as in Residual_VQVAE defaults).
    codebooks = jnp.concatenate(
        [embed, init_codebook(k_e2, 1, codebook_size, dim)], axis=0)  # (2, c, d)
    quant_out, all_inds = residual_vq_forward(x, codebooks)
    quant_out = jax.block_until_ready(quant_out)
    assert quant_out.shape == (batch, seq, dim)
    assert all_inds.shape == (batch, seq, 2)
    assert bool(jnp.all((all_inds >= 0) & (all_inds < codebook_size)))
    assert bool(jnp.all(jnp.isfinite(quant_out)))

    print("KERNEL_OK")
</pallas_src>

<mosaic_0001>
module attributes {stable_mosaic.version = 11 : i64} {
  func.func @_codebook_kernel(%arg0: i32, %arg1: memref<128x32xf32, #tpu.memory_space<vmem>>, %arg2: memref<32x64xbf16, #tpu.memory_space<vmem>>, %arg3: memref<64x32xf32, #tpu.memory_space<vmem>>, %arg4: memref<128x32xf32, #tpu.memory_space<vmem>>, %arg5: memref<1x128xi32, #tpu.memory_space<vmem>>) attributes {dimension_semantics = [#tpu.dimension_semantics<parallel>], iteration_bounds = array<i64: 1>, scalar_prefetch = 0 : i64, scratch_operands = 0 : i64, tpu.core_type = #tpu.core_type<tc>, window_params = [{transform_indices = @transform_0, window_bounds = array<i64: 128, 32>}, {pipeline_mode = #tpu.pipeline_mode<synchronous>, transform_indices = @transform_1, window_bounds = array<i64: 32, 64>}, {pipeline_mode = #tpu.pipeline_mode<synchronous>, transform_indices = @transform_2, window_bounds = array<i64: 64, 32>}, {transform_indices = @transform_3, window_bounds = array<i64: 128, 32>}, {transform_indices = @transform_4, window_bounds = array<i64: 1, 128>}]} {
    %c0 = arith.constant 0 : index
    %c0_0 = arith.constant 0 : index
    %0 = vector.load %arg1[%c0, %c0_0] : memref<128x32xf32, #tpu.memory_space<vmem>>, vector<128x32xf32>
    %1 = arith.mulf %0, %0 : vector<128x32xf32>
    %cst = arith.constant dense<0.000000e+00> : vector<128xf32>
    %2 = vector.multi_reduction <add>, %1, %cst [1] : vector<128x32xf32> to vector<128xf32>
    %3 = vector.shape_cast %2 : vector<128xf32> to vector<128x1xf32>
    %4 = math.sqrt %3 : vector<128x1xf32>
    %cst_1 = arith.constant 9.99999996E-13 : f32
    %5 = vector.broadcast %cst_1 : f32 to vector<128x1xf32>
    %6 = arith.maximumf %4, %5 : vector<128x1xf32>
    %7 = vector.broadcast %6 : vector<128x1xf32> to vector<128x32xf32>
    %8 = arith.divf %0, %7 : vector<128x32xf32>
    %9 = arith.truncf %8 : vector<128x32xf32> to vector<128x32xbf16>
    %c0_2 = arith.constant 0 : index
    %c0_3 = arith.constant 0 : index
    %10 = vector.load %arg2[%c0_2, %c0_3] : memref<32x64xbf16, #tpu.memory_space<vmem>>, vector<32x64xbf16>
    %cst_4 = arith.constant dense<0.000000e+00> : vector<128x64xf32>
    %11 = tpu.matmul %9, %10, %cst_4 {dimension_numbers = #tpu.dot_dimension_numbers<[1], [0], [0], [1], [0, 0, 1, 1], [], []>} : vector<128x32xbf16>, vector<32x64xbf16>, vector<128x64xf32> -> vector<128x64xf32>
    %cst_5 = arith.constant dense<0xFF800000> : vector<128xf32>
    %12 = vector.multi_reduction <maximumf>, %11, %cst_5 [1] : vector<128x64xf32> to vector<128xf32>
    %13 = vector.shape_cast %12 : vector<128xf32> to vector<128x1xf32>
    %14 = tpu.iota {dimensions = array<i32: 1>} : vector<128x64xi32>
    %15 = vector.broadcast %13 : vector<128x1xf32> to vector<128x64xf32>
    %16 = arith.cmpf oeq, %11, %15 : vector<128x64xf32>
    %c64_i32 = arith.constant 64 : i32
    %17 = vector.broadcast %c64_i32 : i32 to vector<128x64xi32>
    %18 = arith.select %16, %14, %17 : vector<128x64xi1>, vector<128x64xi32>
    %cst_6 = arith.constant dense<2147483647> : vector<128xi32>
    %19 = vector.multi_reduction <minsi>, %18, %cst_6 [1] : vector<128x64xi32> to vector<128xi32>
    %20 = vector.shape_cast %19 : vector<128xi32> to vector<1x128xi32>
    %c0_7 = arith.constant 0 : index
    %c0_8 = arith.constant 0 : index
    %21 = vector.load %arg5[%c0_7, %c0_8] : memref<1x128xi32, #tpu.memory_space<vmem>>, vector<1x128xi32>
    tpu.vector_store %arg5[%c0_7, %c0_8], %20 {strides = array<i32>} : memref<1x128xi32, #tpu.memory_space<vmem>>, vector<1x128xi32>,
    %22 = vector.shape_cast %19 : vector<128xi32> to vector<128x1xi32>
    %23 = vector.broadcast %22 : vector<128x1xi32> to vector<128x64xi32>
    %24 = arith.cmpi eq, %14, %23 : vector<128x64xi32>
    %25 = arith.extui %24 : vector<128x64xi1> to vector<128x64xi32>
    %26 = arith.sitofp %25 : vector<128x64xi32> to vector<128x64xf32>
    %c0_9 = arith.constant 0 : index
    %c0_10 = arith.constant 0 : index
    %27 = vector.load %arg3[%c0_9, %c0_10] : memref<64x32xf32, #tpu.memory_space<vmem>>, vector<64x32xf32>
    %cst_11 = arith.constant dense<0.000000e+00> : vector<128x32xf32>
    %28 = tpu.matmul %26, %27, %cst_11 {dimension_numbers = #tpu.dot_dimension_numbers<[1], [0], [0], [1], [0, 0, 1, 1], [], []>} : vector<128x64xf32>, vector<64x32xf32>, vector<128x32xf32> -> vector<128x32xf32>
    %c0_12 = arith.constant 0 : index
    %c0_13 = arith.constant 0 : index
    %29 = vector.load %arg4[%c0_12, %c0_13] : memref<128x32xf32, #tpu.memory_space<vmem>>, vector<128x32xf32>
    tpu.vector_store %arg4[%c0_12, %c0_13], %28 {strides = array<i32>} : memref<128x32xf32, #tpu.memory_space<vmem>>, vector<128x32xf32>,
    return
  }
  func.func @transform_0(%arg0: i32) -> (i32, i32) {
    %c0_i32 = arith.constant 0 : i32
    %c0_i32_0 = arith.constant 0 : i32
    return %arg0, %c0_i32 : i32, i32
  }
  func.func @transform_1(%arg0: i32) -> (i32, i32) {
    %c0_i32 = arith.constant 0 : i32
    %c0_i32_0 = arith.constant 0 : i32
    %c0_i32_1 = arith.constant 0 : i32
    return %c0_i32, %c0_i32_0 : i32, i32
  }
  func.func @transform_2(%arg0: i32) -> (i32, i32) {
    %c0_i32 = arith.constant 0 : i32
    %c0_i32_0 = arith.constant 0 : i32
    %c0_i32_1 = arith.constant 0 : i32
    return %c0_i32, %c0_i32_0 : i32, i32
  }
  func.func @transform_3(%arg0: i32) -> (i32, i32) {
    %c0_i32 = arith.constant 0 : i32
    %c0_i32_0 = arith.constant 0 : i32
    return %arg0, %c0_i32 : i32, i32
  }
  func.func @transform_4(%arg0: i32) -> (i32, i32) {
    %c0_i32 = arith.constant 0 : i32
    %c0_i32_0 = arith.constant 0 : i32
    return %c0_i32, %arg0 : i32, i32
  }
}

</mosaic_0001>

<llo_original>
// kernel: tpu_custom_call.1
$region0: #{tpu_custom_call.1}
  #allocation0 [shape = 'u32[]', space=smem, size = 0x4, offset = 0x4, fixed_abs, tag = 'smem constant byte address 0x4 - core index']
  #allocation1 [shape = 'u32[144,128]{1,0:T(1,128)}', space=vmem, size = 0x12000, scoped, tag = 'internal scratch']
  %s0 = inlined_call_operand.vmem [shape: f32[128,32], index: 0, kind: input, shape index: {}]
  %s1 = inlined_call_operand.vmem [shape: bf16[32,64], index: 1, kind: input, shape index: {}]
  %s2 = inlined_call_operand.vmem [shape: f32[64,32], index: 2, kind: input, shape index: {}]
  %s3 = inlined_call_operand.vmem [shape: f32[128,32], index: 3, kind: output, shape index: {0}]
  %s4 = inlined_call_operand.hbm [shape: s32[1,128], index: 4, kind: output, shape index: {1}]
  %5 = xla_tuple %s3, %s4
  %s6 = sld [smem:[#allocation0]]
  $region30: #{tpu_custom_call.1} parent=0
    _
  %s8 = ssub.s32 1, %s6
  %s9 = scalar_select 0, %s8, %s6
  $region1: #{tpu_custom_call.1} parent=0
    #allocation2 [shape = 'u8[512]{0}', space=vmem, size = 0x400, scoped, tag = 'output window, operand 1, single buffered']
    #allocation3 [shape = 's32[1]{0}', space=sflag, size = 0x4, scoped, tag = 'scoped memory for tpu_custom_call.1']
    %10 = vsyncpa [#allocation3], 0
    // Predicated region
    $region2: #{tpu_custom_call.1} parent=1 // pred_check
      _
    $region3: #{tpu_custom_call.1} parent=1 // pred_check_branch
      %12 = sbr.rel (0) target = $region5
    $region4: #{tpu_custom_call.1} parent=1 // pred_region
      _
    $region5: #{tpu_custom_call.1} parent=1 // pred_fallthru
      _
    // Predicated region
    $region6: #{tpu_custom_call.1} parent=1 // pred_check
      _
    $region7: #{tpu_custom_call.1} parent=1 // pred_check_branch
      %14 = sbr.rel (0) target = $region9
    $region8: #{tpu_custom_call.1} parent=1 // pred_region
      _
    $region9: #{tpu_custom_call.1} parent=1 // pred_fallthru
      _
    // Predicated region
    $region10: #{tpu_custom_call.1} parent=1 // pred_check
      _
    $region11: #{tpu_custom_call.1} parent=1 // pred_check_branch
      %16 = sbr.rel (0) target = $region13
    $region12: #{tpu_custom_call.1} parent=1 // pred_region
      _
    $region13: #{tpu_custom_call.1} parent=1 // pred_fallthru
      _
    %v18 = vld [vmem:[%s0] sm:$0xff]
    %v19 = vld [vmem:[%s0 + $0x8] sm:$0xff]
    %v20 = vld [vmem:[%s0 + $0x10] sm:$0xff]
    %v21 = vld [vmem:[%s0 + $0x18] sm:$0xff]
    %v22 = vld [vmem:[%s0 + $0x20] sm:$0xff]
    %v23 = vld [vmem:[%s0 + $0x28] sm:$0xff]
    %v24 = vld [vmem:[%s0 + $0x30] sm:$0xff]
    %v25 = vld [vmem:[%s0 + $0x38] sm:$0xff]
    %v26 = vld [vmem:[%s0 + $0x40] sm:$0xff]
    %v27 = vld [vmem:[%s0 + $0x48] sm:$0xff]
    %v28 = vld [vmem:[%s0 + $0x50] sm:$0xff]
    %v29 = vld [vmem:[%s0 + $0x58] sm:$0xff]
    %v30 = vld [vmem:[%s0 + $0x60] sm:$0xff]
    %v31 = vld [vmem:[%s0 + $0x68] sm:$0xff]
    %v32 = vld [vmem:[%s0 + $0x70] sm:$0xff]
    %v33 = vld [vmem:[%s0 + $0x78] sm:$0xff]
    %v34 = vmul.f32 %v18, %v18
    %v35 = vmul.f32 %v19, %v19
    %v36 = vmul.f32 %v20, %v20
    %v37 = vmul.f32 %v21, %v21
    %v38 = vmul.f32 %v22, %v22
    %v39 = vmul.f32 %v23, %v23
    %v40 = vmul.f32 %v24, %v24
    %v41 = vmul.f32 %v25, %v25
    %v42 = vmul.f32 %v26, %v26
    %v43 = vmul.f32 %v27, %v27
    %v44 = vmul.f32 %v28, %v28
    %v45 = vmul.f32 %v29, %v29
    %v46 = vmul.f32 %v30, %v30
    %v47 = vmul.f32 %v31, %v31
    %v48 = vmul.f32 %v32, %v32
    %v49 = vmul.f32 %v33, %v33
    %vm50 = vcmask 261120
    %v51 = vsel %vm50, %v34, 0.0
    %52 = vadd.xlane.f32.xlu0 %v51
    %v53 = vpop.xlane.xlu0 %52
    %v54 = vsel %vm50, %v35, 0.0
    %55 = vadd.xlane.f32.xlu0 %v54
    %v56 = vpop.xlane.xlu0 %55
    %v57 = vsel %vm50, %v36, 0.0
    %58 = vadd.xlane.f32.xlu0 %v57
    %v59 = vpop.xlane.xlu0 %58
    %v60 = vsel %vm50, %v37, 0.0
    %61 = vadd.xlane.f32.xlu0 %v60
    %v62 = vpop.xlane.xlu0 %61
    %v63 = vsel %vm50, %v38, 0.0
    %64 = vadd.xlane.f32.xlu0 %v63
    %v65 = vpop.xlane.xlu0 %64
    %v66 = vsel %vm50, %v39, 0.0
    %67 = vadd.xlane.f32.xlu0 %v66
    %v68 = vpop.xlane.xlu0 %67
    %v69 = vsel %vm50, %v40, 0.0
    %70 = vadd.xlane.f32.xlu0 %v69
    %v71 = vpop.xlane.xlu0 %70
    %v72 = vsel %vm50, %v41, 0.0
    %73 = vadd.xlane.f32.xlu0 %v72
    %v74 = vpop.xlane.xlu0 %73
    %v75 = vsel %vm50, %v42, 0.0
    %76 = vadd.xlane.f32.xlu0 %v75
    %v77 = vpop.xlane.xlu0 %76
    %v78 = vsel %vm50, %v43, 0.0
    %79 = vadd.xlane.f32.xlu0 %v78
    %v80 = vpop.xlane.xlu0 %79
    %v81 = vsel %vm50, %v44, 0.0
    %82 = vadd.xlane.f32.xlu0 %v81
    %v83 = vpop.xlane.xlu0 %82
    %v84 = vsel %vm50, %v45, 0.0
    %85 = vadd.xlane.f32.xlu0 %v84
    %v86 = vpop.xlane.xlu0 %85
    %v87 = vsel %vm50, %v46, 0.0
    %88 = vadd.xlane.f32.xlu0 %v87
    %v89 = vpop.xlane.xlu0 %88
    %v90 = vsel %vm50, %v47, 0.0
    %91 = vadd.xlane.f32.xlu0 %v90
    %v92 = vpop.xlane.xlu0 %91
    %v93 = vsel %vm50, %v48, 0.0
    %94 = vadd.xlane.f32.xlu0 %v93
    %v95 = vpop.xlane.xlu0 %94
    %v96 = vsel %vm50, %v49, 0.0
    %97 = vadd.xlane.f32.xlu0 %v96
    %v98 = vpop.xlane.xlu0 %97
    %v99 = vrsqrt.pop %v53
    %v100 = vmul.f32 %v53, %v99
    %vm101 = vcmp.eq.f32.partialorder %v53, inf
    %v102 = vsel %vm101, %v53, %v100
    %vm103 = vcmp.eq.f32.partialorder %v53, 0.0
    %v104 = vand.u32 %v53, 2147483648
    %v105 = vsel %vm103, %v104, %v102
    %v106 = vrsqrt.pop %v56
    %v107 = vmul.f32 %v56, %v106
    %vm108 = vcmp.eq.f32.partialorder %v56, inf
    %v109 = vsel %vm108, %v56, %v107
    %vm110 = vcmp.eq.f32.partialorder %v56, 0.0
    %v111 = vand.u32 %v56, 2147483648
    %v112 = vsel %vm110, %v111, %v109
    %v113 = vrsqrt.pop %v59
    %v114 = vmul.f32 %v59, %v113
    %vm115 = vcmp.eq.f32.partialorder %v59, inf
    %v116 = vsel %vm115, %v59, %v114
    %vm117 = vcmp.eq.f32.partialorder %v59, 0.0
    %v118 = vand.u32 %v59, 2147483648
    %v119 = vsel %vm117, %v118, %v116
    %v120 = vrsqrt.pop %v62
    %v121 = vmul.f32 %v62, %v120
    %vm122 = vcmp.eq.f32.partialorder %v62, inf
    %v123 = vsel %vm122, %v62, %v121
    %vm124 = vcmp.eq.f32.partialorder %v62, 0.0
    %v125 = vand.u32 %v62, 2147483648
    %v126 = vsel %vm124, %v125, %v123
    %v127 = vrsqrt.pop %v65
    %v128 = vmul.f32 %v65, %v127
    %vm129 = vcmp.eq.f32.partialorder %v65, inf
    %v130 = vsel %vm129, %v65, %v128
    %vm131 = vcmp.eq.f32.partialorder %v65, 0.0
    %v132 = vand.u32 %v65, 2147483648
    %v133 = vsel %vm131, %v132, %v130
    %v134 = vrsqrt.pop %v68
    %v135 = vmul.f32 %v68, %v134
    %vm136 = vcmp.eq.f32.partialorder %v68, inf
    %v137 = vsel %vm136, %v68, %v135
    %vm138 = vcmp.eq.f32.partialorder %v68, 0.0
    %v139 = vand.u32 %v68, 2147483648
    %v140 = vsel %vm138, %v139, %v137
    %v141 = vrsqrt.pop %v71
    %v142 = vmul.f32 %v71, %v141
    %vm143 = vcmp.eq.f32.partialorder %v71, inf
    %v144 = vsel %vm143, %v71, %v142
    %vm145 = vcmp.eq.f32.partialorder %v71, 0.0
    %v146 = vand.u32 %v71, 2147483648
    %v147 = vsel %vm145, %v146, %v144
    %v148 = vrsqrt.pop %v74
    %v149 = vmul.f32 %v74, %v148
    %vm150 = vcmp.eq.f32.partialorder %v74, inf
    %v151 = vsel %vm150, %v74, %v149
    %vm152 = vcmp.eq.f32.partialorder %v74, 0.0
    %v153 = vand.u32 %v74, 2147483648
    %v154 = vsel %vm152, %v153, %v151
    %v155 = vrsqrt.pop %v77
    %v156 = vmul.f32 %v77, %v155
    %vm157 = vcmp.eq.f32.partialorder %v77, inf
    %v158 = vsel %vm157, %v77, %v156
    %vm159 = vcmp.eq.f32.partialorder %v77, 0.0
    %v160 = vand.u32 %v77, 2147483648
    %v161 = vsel %vm159, %v160, %v158
    %v162 = vrsqrt.pop %v80
    %v163 = vmul.f32 %v80, %v162
    %vm164 = vcmp.eq.f32.partialorder %v80, inf
    %v165 = vsel %vm164, %v80, %v163
    %vm166 = vcmp.eq.f32.partialorder %v80, 0.0
    %v167 = vand.u32 %v80, 2147483648
    %v168 = vsel %vm166, %v167, %v165
    %v169 = vrsqrt.pop %v83
    %v170 = vmul.f32 %v83, %v169
    %vm171 = vcmp.eq.f32.partialorder %v83, inf
    %v172 = vsel %vm171, %v83, %v170
    %vm173 = vcmp.eq.f32.partialorder %v83, 0.0
    %v174 = vand.u32 %v83, 2147483648
    %v175 = vsel %vm173, %v174, %v172
    %v176 = vrsqrt.pop %v86
    %v177 = vmul.f32 %v86, %v176
    %vm178 = vcmp.eq.f32.partialorder %v86, inf
    %v179 = vsel %vm178, %v86, %v177
    %vm180 = vcmp.eq.f32.partialorder %v86, 0.0
    %v181 = vand.u32 %v86, 2147483648
    %v182 = vsel %vm180, %v181, %v179
    %v183 = vrsqrt.pop %v89
    %v184 = vmul.f32 %v89, %v183
    %vm185 = vcmp.eq.f32.partialorder %v89, inf
    %v186 = vsel %vm185, %v89, %v184
    %vm187 = vcmp.eq.f32.partialorder %v89, 0.0
    %v188 = vand.u32 %v89, 2147483648
    %v189 = vsel %vm187, %v188, %v186
    %v190 = vrsqrt.pop %v92
    %v191 = vmul.f32 %v92, %v190
    %vm192 = vcmp.eq.f32.partialorder %v92, inf
    %v193 = vsel %vm192, %v92, %v191
    %vm194 = vcmp.eq.f32.partialorder %v92, 0.0
    %v195 = vand.u32 %v92, 2147483648
    %v196 = vsel %vm194, %v195, %v193
    %v197 = vrsqrt.pop %v95
    %v198 = vmul.f32 %v95, %v197
    %vm199 = vcmp.eq.f32.partialorder %v95, inf
    %v200 = vsel %vm199, %v95, %v198
    %vm201 = vcmp.eq.f32.partialorder %v95, 0.0
    %v202 = vand.u32 %v95, 2147483648
    %v203 = vsel %vm201, %v202, %v200
    %v204 = vrsqrt.pop %v98
    %v205 = vmul.f32 %v98, %v204
    %vm206 = vcmp.eq.f32.partialorder %v98, inf
    %v207 = vsel %vm206, %v98, %v205
    %vm208 = vcmp.eq.f32.partialorder %v98, 0.0
    %v209 = vand.u32 %v98, 2147483648
    %v210 = vsel %vm208, %v209, %v207
    %v211 = vmax.f32 %v105, 1e-12
    %v212 = vmax.f32 %v112, 1e-12
    %v213 = vmax.f32 %v119, 1e-12
    %v214 = vmax.f32 %v126, 1e-12
    %v215 = vmax.f32 %v133, 1e-12
    %v216 = vmax.f32 %v140, 1e-12
    %v217 = vmax.f32 %v147, 1e-12
    %v218 = vmax.f32 %v154, 1e-12
    %v219 = vmax.f32 %v161, 1e-12
    %v220 = vmax.f32 %v168, 1e-12
    %v221 = vmax.f32 %v175, 1e-12
    %v222 = vmax.f32 %v182, 1e-12
    %v223 = vmax.f32 %v189, 1e-12
    %v224 = vmax.f32 %v196, 1e-12
    %v225 = vmax.f32 %v203, 1e-12
    %v226 = vmax.f32 %v210, 1e-12
    %v227 = vrcp.pop %v211
    %v228 = vmul.f32 %v18, %v227
    %v229 = vrcp.pop %v212
    %v230 = vmul.f32 %v19, %v229
    %v231 = vrcp.pop %v213
    %v232 = vmul.f32 %v20, %v231
    %v233 = vrcp.pop %v214
    %v234 = vmul.f32 %v21, %v233
    %v235 = vrcp.pop %v215
    %v236 = vmul.f32 %v22, %v235
    %v237 = vrcp.pop %v216
    %v238 = vmul.f32 %v23, %v237
    %v239 = vrcp.pop %v217
    %v240 = vmul.f32 %v24, %v239
    %v241 = vrcp.pop %v218
    %v242 = vmul.f32 %v25, %v241
    %v243 = vrcp.pop %v219
    %v244 = vmul.f32 %v26, %v243
    %v245 = vrcp.pop %v220
    %v246 = vmul.f32 %v27, %v245
    %v247 = vrcp.pop %v221
    %v248 = vmul.f32 %v28, %v247
    %v249 = vrcp.pop %v222
    %v250 = vmul.f32 %v29, %v249
    %v251 = vrcp.pop %v223
    %v252 = vmul.f32 %v30, %v251
    %v253 = vrcp.pop %v224
    %v254 = vmul.f32 %v31, %v253
    %v255 = vrcp.pop %v225
    %v256 = vmul.f32 %v32, %v255
    %v257 = vrcp.pop %v226
    %v258 = vmul.f32 %v33, %v257
    %v259 = vpack.c.bf16 %v230, %v228
    %v260 = vpack.c.bf16 %v234, %v232
    %v261 = vpack.c.bf16 %v238, %v236
    %v262 = vpack.c.bf16 %v242, %v240
    %v263 = vpack.c.bf16 %v246, %v244
    %v264 = vpack.c.bf16 %v250, %v248
    %v265 = vpack.c.bf16 %v254, %v252
    %v266 = vpack.c.bf16 %v258, %v256
    %v267 = vld [vmem:[%s1] sm:$0xf]
    %v268 = vld [vmem:[%s1 + $0x4] sm:$0xf]
    %v269 = vld [vmem:[%s1 + $0x8] sm:$0xf]
    %v270 = vld [vmem:[%s1 + $0xc] sm:$0xf]
    %v275 = vunpack.c.l.b16 %v267
    %v276 = vunpack.c.l.b16 %v268
    %v277 = vunpack.c.l.b16 %v269
    %v278 = vunpack.c.l.b16 %v270
    %v279 = vpack.c.b16 %v276, %v275
    %v280 = vpack.c.b16 %v278, %v277
    %v284 = vsel %vm50, %v259, 0
    %v287 = vsel %vm50, %v260, 0
    %v290 = vsel %vm50, %v261, 0
    %v293 = vsel %vm50, %v262, 0
    %v296 = vsel %vm50, %v263, 0
    %v299 = vsel %vm50, %v264, 0
    %v302 = vsel %vm50, %v265, 0
    %v305 = vsel %vm50, %v266, 0
    %307 = vmatprep.subr.bf16.mxu0 0
    %308 = vmatpush1.bf16.msra.mxu0 0
    %309 = vmatprep.subr.bf16.mxu0 0
    %310 = vmatpush1.bf16.msra.mxu0 0
    %311 = vmatprep.subr.bf16.mxu0 0
    %312 = vmatpush1.bf16.msra.mxu0 0
    %313 = vmatprep.subr.bf16.mxu0 0
    %314 = vmatpush1.bf16.msra.mxu0 0
    %315 = vmatprep.subr.bf16.mxu0 0
    %316 = vmatpush1.bf16.msra.mxu0 0
    %317 = vmatprep.subr.bf16.mxu0 0
    %318 = vmatpush1.bf16.msra.mxu0 0
    %319 = vmatprep.subr.bf16.mxu0 0
    %320 = vmatpush1.bf16.msra.mxu0 %v280
    %321 = vmatprep.subr.bf16.mxu0 0
    %322 = vmatpush1.bf16.msra.mxu0 %v279
    %323 = vmatprep.subr.bf16.mxu0 0
    %324 = vmatpush2.bf16.msra.mxu0 0
    %325 = vmatprep.subr.bf16.mxu0 0
    %326 = vmatpush2.bf16.msra.mxu0 0
    %327 = vmatprep.subr.bf16.mxu0 0
    %328 = vmatpush2.bf16.msra.mxu0 0
    %329 = vmatprep.subr.bf16.mxu0 0
    %330 = vmatpush2.bf16.msra.mxu0 0
    %331 = vmatprep.subr.bf16.mxu0 0
    %332 = vmatpush2.bf16.msra.mxu0 0
    %333 = vmatprep.subr.bf16.mxu0 0
    %334 = vmatpush2.bf16.msra.mxu0 0
    %335 = vmatprep.subr.bf16.mxu0 0
    %336 = vmatpush2.bf16.msra.mxu0 0
    %337 = vmatprep.subr.bf16.mxu0 0
    %338 = vmatpush2.bf16.msra.mxu0 0
    %339 = vmatprep.mubr.bf16.mxu0 0
    %340 = vmatmul.mubr.bf16.gmra.mxu0 %v284
    %v341 = vpop.f32.mrf.mxu0
    %v342 = vadd.f32 0.0, %v341
    %v343 = vpop.f32.mrf.mxu0
    %v344 = vpop.f32.mrf.mxu0
    %v345 = vadd.f32 0.0, %v344
    %v346 = vpop.f32.mrf.mxu0
    %347 = vmatprep.mubr.bf16.mxu0 0
    %348 = vmatmul.mubr.bf16.gmra.mxu0 %v287
    %v349 = vpop.f32.mrf.mxu0
    %v350 = vadd.f32 0.0, %v349
    %v351 = vpop.f32.mrf.mxu0
    %v352 = vpop.f32.mrf.mxu0
    %v353 = vadd.f32 0.0, %v352
    %v354 = vpop.f32.mrf.mxu0
    %355 = vmatprep.mubr.bf16.mxu0 0
    %356 = vmatmul.mubr.bf16.gmra.mxu0 %v290
    %v357 = vpop.f32.mrf.mxu0
    %v358 = vadd.f32 0.0, %v357
    %v359 = vpop.f32.mrf.mxu0
    %v360 = vpop.f32.mrf.mxu0
    %v361 = vadd.f32 0.0, %v360
    %v362 = vpop.f32.mrf.mxu0
    %363 = vmatprep.mubr.bf16.mxu0 0
    %364 = vmatmul.mubr.bf16.gmra.mxu0 %v293
    %v365 = vpop.f32.mrf.mxu0
    %v366 = vadd.f32 0.0, %v365
    %v367 = vpop.f32.mrf.mxu0
    %v368 = vpop.f32.mrf.mxu0
    %v369 = vadd.f32 0.0, %v368
    %v370 = vpop.f32.mrf.mxu0
    %371 = vmatprep.mubr.bf16.mxu0 0
    %372 = vmatmul.mubr.bf16.gmra.mxu0 %v296
    %v373 = vpop.f32.mrf.mxu0
    %v374 = vadd.f32 0.0, %v373
    %v375 = vpop.f32.mrf.mxu0
    %v376 = vpop.f32.mrf.mxu0
    %v377 = vadd.f32 0.0, %v376
    %v378 = vpop.f32.mrf.mxu0
    %379 = vmatprep.mubr.bf16.mxu0 0
    %380 = vmatmul.mubr.bf16.gmra.mxu0 %v299
    %v381 = vpop.f32.mrf.mxu0
    %v382 = vadd.f32 0.0, %v381
    %v383 = vpop.f32.mrf.mxu0
    %v384 = vpop.f32.mrf.mxu0
    %v385 = vadd.f32 0.0, %v384
    %v386 = vpop.f32.mrf.mxu0
    %387 = vmatprep.mubr.bf16.mxu0 0
    %388 = vmatmul.mubr.bf16.gmra.mxu0 %v302
    %v389 = vpop.f32.mrf.mxu0
    %v390 = vadd.f32 0.0, %v389
    %v391 = vpop.f32.mrf.mxu0
    %v392 = vpop.f32.mrf.mxu0
    %v393 = vadd.f32 0.0, %v392
    %v394 = vpop.f32.mrf.mxu0
    %395 = vmatprep.mubr.bf16.mxu0 0
    %396 = vmatmul.mubr.bf16.gmra.mxu0 %v305
    %v397 = vpop.f32.mrf.mxu0
    %v398 = vadd.f32 0.0, %v397
    %v399 = vpop.f32.mrf.mxu0
    %v400 = vpop.f32.mrf.mxu0
    %v401 = vadd.f32 0.0, %v400
    %v402 = vpop.f32.mrf.mxu0
    %403 = vdwg.mxu0
    %vm404 = vcmask 523264
    %v405 = vsel %vm404, %v342, -inf
    %406 = vmax.xlane.f32.xlu0 %v405
    %v407 = vpop.xlane.xlu0 %406
    %v408 = vsel %vm404, %v345, -inf
    %409 = vmax.xlane.f32.xlu0 %v408
    %v410 = vpop.xlane.xlu0 %409
    %v411 = vsel %vm404, %v350, -inf
    %412 = vmax.xlane.f32.xlu0 %v411
    %v413 = vpop.xlane.xlu0 %412
    %v414 = vsel %vm404, %v353, -inf
    %415 = vmax.xlane.f32.xlu0 %v414
    %v416 = vpop.xlane.xlu0 %415
    %v417 = vsel %vm404, %v358, -inf
    %418 = vmax.xlane.f32.xlu0 %v417
    %v419 = vpop.xlane.xlu0 %418
    %v420 = vsel %vm404, %v361, -inf
    %421 = vmax.xlane.f32.xlu0 %v420
    %v422 = vpop.xlane.xlu0 %421
    %v423 = vsel %vm404, %v366, -inf
    %424 = vmax.xlane.f32.xlu0 %v423
    %v425 = vpop.xlane.xlu0 %424
    %v426 = vsel %vm404, %v369, -inf
    %427 = vmax.xlane.f32.xlu0 %v426
    %v428 = vpop.xlane.xlu0 %427
    %v429 = vsel %vm404, %v374, -inf
    %430 = vmax.xlane.f32.xlu0 %v429
    %v431 = vpop.xlane.xlu0 %430
    %v432 = vsel %vm404, %v377, -inf
    %433 = vmax.xlane.f32.xlu0 %v432
    %v434 = vpop.xlane.xlu0 %433
    %v435 = vsel %vm404, %v382, -inf
    %436 = vmax.xlane.f32.xlu0 %v435
    %v437 = vpop.xlane.xlu0 %436
    %v438 = vsel %vm404, %v385, -inf
    %439 = vmax.xlane.f32.xlu0 %v438
    %v440 = vpop.xlane.xlu0 %439
    %v441 = vsel %vm404, %v390, -inf
    %442 = vmax.xlane.f32.xlu0 %v441
    %v443 = vpop.xlane.xlu0 %442
    %v444 = vsel %vm404, %v393, -inf
    %445 = vmax.xlane.f32.xlu0 %v444
    %v446 = vpop.xlane.xlu0 %445
    %v447 = vsel %vm404, %v398, -inf
    %448 = vmax.xlane.f32.xlu0 %v447
    %v449 = vpop.xlane.xlu0 %448
    %v450 = vsel %vm404, %v401, -inf
    %451 = vmax.xlane.f32.xlu0 %v450
    %v452 = vpop.xlane.xlu0 %451
    %v453 = vlaneseq
    %v454 = vand.u32 %v453, 127
    %vm455 = vcmp.eq.f32.partialorder %v342, %v407
    %vm456 = vcmp.eq.f32.partialorder %v345, %v410
    %vm457 = vcmp.eq.f32.partialorder %v350, %v413
    %vm458 = vcmp.eq.f32.partialorder %v353, %v416
    %vm459 = vcmp.eq.f32.partialorder %v358, %v419
    %vm460 = vcmp.eq.f32.partialorder %v361, %v422
    %vm461 = vcmp.eq.f32.partialorder %v366, %v425
    %vm462 = vcmp.eq.f32.partialorder %v369, %v428
    %vm463 = vcmp.eq.f32.partialorder %v374, %v431
    %vm464 = vcmp.eq.f32.partialorder %v377, %v434
    %vm465 = vcmp.eq.f32.partialorder %v382, %v437
    %vm466 = vcmp.eq.f32.partialorder %v385, %v440
    %vm467 = vcmp.eq.f32.partialorder %v390, %v443
    %vm468 = vcmp.eq.f32.partialorder %v393, %v446
    %vm469 = vcmp.eq.f32.partialorder %v398, %v449
    %vm470 = vcmp.eq.f32.partialorder %v401, %v452
    %v471 = vsel %vm455, %v454, 64
    %v472 = vsel %vm456, %v454, 64
    %v473 = vsel %vm457, %v454, 64
    %v474 = vsel %vm458, %v454, 64
    %v475 = vsel %vm459, %v454, 64
    %v476 = vsel %vm460, %v454, 64
    %v477 = vsel %vm461, %v454, 64
    %v478 = vsel %vm462, %v454, 64
    %v479 = vsel %vm463, %v454, 64
    %v480 = vsel %vm464, %v454, 64
    %v481 = vsel %vm465, %v454, 64
    %v482 = vsel %vm466, %v454, 64
    %v483 = vsel %vm467, %v454, 64
    %v484 = vsel %vm468, %v454, 64
    %v485 = vsel %vm469, %v454, 64
    %v486 = vsel %vm470, %v454, 64
    %v487 = vsel %vm404, %v471, 2147483647
    %v488 = vand.u32 %v487, 65535
    %v489 = vshra.s32 %v487, 16
    %v490 = vcvt.s32.f32 %v488
    %v491 = vcvt.s32.f32 %v489
    %492 = vmin.xlane.f32.xlu0 %v491
    %v493 = vpop.xlane.xlu0 %492
    %vm494 = vcmp.eq.f32.partialorder %v491, %v493
    %v495 = vsel %vm494, %v490, inf
    %496 = vmin.xlane.f32.xlu0 %v495
    %v497 = vpop.xlane.xlu0 %496
    %v498 = vcvt.f32.s32 %v497
    %v499 = vcvt.f32.s32 %v493
    %v500 = vshll.u32 %v499, 16
    %v501 = vadd.s32 %v500, %v498
    %v502 = vsel %vm404, %v472, 2147483647
    %v503 = vand.u32 %v502, 65535
    %v504 = vshra.s32 %v502, 16
    %v505 = vcvt.s32.f32 %v503
    %v506 = vcvt.s32.f32 %v504
    %507 = vmin.xlane.f32.xlu0 %v506
    %v508 = vpop.xlane.xlu0 %507
    %vm509 = vcmp.eq.f32.partialorder %v506, %v508
    %v510 = vsel %vm509, %v505, inf
    %511 = vmin.xlane.f32.xlu0 %v510
    %v512 = vpop.xlane.xlu0 %511
    %v513 = vcvt.f32.s32 %v512
    %v514 = vcvt.f32.s32 %v508
    %v515 = vshll.u32 %v514, 16
    %v516 = vadd.s32 %v515, %v513
    %v517 = vsel %vm404, %v473, 2147483647
    %v518 = vand.u32 %v517, 65535
    %v519 = vshra.s32 %v517, 16
    %v520 = vcvt.s32.f32 %v518
    %v521 = vcvt.s32.f32 %v519
    %522 = vmin.xlane.f32.xlu0 %v521
    %v523 = vpop.xlane.xlu0 %522
    %vm524 = vcmp.eq.f32.partialorder %v521, %v523
    %v525 = vsel %vm524, %v520, inf
    %526 = vmin.xlane.f32.xlu0 %v525
    %v527 = vpop.xlane.xlu0 %526
    %v528 = vcvt.f32.s32 %v527
    %v529 = vcvt.f32.s32 %v523
    %v530 = vshll.u32 %v529, 16
    %v531 = vadd.s32 %v530, %v528
    %v532 = vsel %vm404, %v474, 2147483647
    %v533 = vand.u32 %v532, 65535
    %v534 = vshra.s32 %v532, 16
    %v535 = vcvt.s32.f32 %v533
    %v536 = vcvt.s32.f32 %v534
    %537 = vmin.xlane.f32.xlu0 %v536
    %v538 = vpop.xlane.xlu0 %537
    %vm539 = vcmp.eq.f32.partialorder %v536, %v538
    %v540 = vsel %vm539, %v535, inf
    %541 = vmin.xlane.f32.xlu0 %v540
    %v542 = vpop.xlane.xlu0 %541
    %v543 = vcvt.f32.s32 %v542
    %v544 = vcvt.f32.s32 %v538
    %v545 = vshll.u32 %v544, 16
    %v546 = vadd.s32 %v545, %v543
    %v547 = vsel %vm404, %v475, 2147483647
    %v548 = vand.u32 %v547, 65535
    %v549 = vshra.s32 %v547, 16
    %v550 = vcvt.s32.f32 %v548
    %v551 = vcvt.s32.f32 %v549
    %552 = vmin.xlane.f32.xlu0 %v551
    %v553 = vpop.xlane.xlu0 %552
    %vm554 = vcmp.eq.f32.partialorder %v551, %v553
    %v555 = vsel %vm554, %v550, inf
    %556 = vmin.xlane.f32.xlu0 %v555
    %v557 = vpop.xlane.xlu0 %556
    %v558 = vcvt.f32.s32 %v557
    %v559 = vcvt.f32.s32 %v553
    %v560 = vshll.u32 %v559, 16
    %v561 = vadd.s32 %v560, %v558
    %v562 = vsel %vm404, %v476, 2147483647
    %v563 = vand.u32 %v562, 65535
    %v564 = vshra.s32 %v562, 16
    %v565 = vcvt.s32.f32 %v563
    %v566 = vcvt.s32.f32 %v564
    %567 = vmin.xlane.f32.xlu0 %v566
    %v568 = vpop.xlane.xlu0 %567
    %vm569 = vcmp.eq.f32.partialorder %v566, %v568
    %v570 = vsel %vm569, %v565, inf
    %571 = vmin.xlane.f32.xlu0 %v570
    %v572 = vpop.xlane.xlu0 %571
    %v573 = vcvt.f32.s32 %v572
    %v574 = vcvt.f32.s32 %v568
    %v575 = vshll.u32 %v574, 16
    %v576 = vadd.s32 %v575, %v573
    %v577 = vsel %vm404, %v477, 2147483647
    %v578 = vand.u32 %v577, 65535
    %v579 = vshra.s32 %v577, 16
    %v580 = vcvt.s32.f32 %v578
    %v581 = vcvt.s32.f32 %v579
    %582 = vmin.xlane.f32.xlu0 %v581
    %v583 = vpop.xlane.xlu0 %582
    %vm584 = vcmp.eq.f32.partialorder %v581, %v583
    %v585 = vsel %vm584, %v580, inf
    %586 = vmin.xlane.f32.xlu0 %v585
    %v587 = vpop.xlane.xlu0 %586
    %v588 = vcvt.f32.s32 %v587
    %v589 = vcvt.f32.s32 %v583
    %v590 = vshll.u32 %v589, 16
    %v591 = vadd.s32 %v590, %v588
    %v592 = vsel %vm404, %v478, 2147483647
    %v593 = vand.u32 %v592, 65535
    %v594 = vshra.s32 %v592, 16
    %v595 = vcvt.s32.f32 %v593
    %v596 = vcvt.s32.f32 %v594
    %597 = vmin.xlane.f32.xlu0 %v596
    %v598 = vpop.xlane.xlu0 %597
    %vm599 = vcmp.eq.f32.partialorder %v596, %v598
    %v600 = vsel %vm599, %v595, inf
    %601 = vmin.xlane.f32.xlu0 %v600
    %v602 = vpop.xlane.xlu0 %601
    %v603 = vcvt.f32.s32 %v602
    %v604 = vcvt.f32.s32 %v598
    %v605 = vshll.u32 %v604, 16
    %v606 = vadd.s32 %v605, %v603
    %v607 = vsel %vm404, %v479, 2147483647
    %v608 = vand.u32 %v607, 65535
    %v609 = vshra.s32 %v607, 16
    %v610 = vcvt.s32.f32 %v608
    %v611 = vcvt.s32.f32 %v609
    %612 = vmin.xlane.f32.xlu0 %v611
    %v613 = vpop.xlane.xlu0 %612
    %vm614 = vcmp.eq.f32.partialorder %v611, %v613
    %v615 = vsel %vm614, %v610, inf
    %616 = vmin.xlane.f32.xlu0 %v615
    %v617 = vpop.xlane.xlu0 %616
    %v618 = vcvt.f32.s32 %v617
    %v619 = vcvt.f32.s32 %v613
    %v620 = vshll.u32 %v619, 16
    %v621 = vadd.s32 %v620, %v618
    %v622 = vsel %vm404, %v480, 2147483647
    %v623 = vand.u32 %v622, 65535
    %v624 = vshra.s32 %v622, 16
    %v625 = vcvt.s32.f32 %v623
    %v626 = vcvt.s32.f32 %v624
    %627 = vmin.xlane.f32.xlu0 %v626
    %v628 = vpop.xlane.xlu0 %627
    %vm629 = vcmp.eq.f32.partialorder %v626, %v628
    %v630 = vsel %vm629, %v625, inf
    %631 = vmin.xlane.f32.xlu0 %v630
    %v632 = vpop.xlane.xlu0 %631
    %v633 = vcvt.f32.s32 %v632
    %v634 = vcvt.f32.s32 %v628
    %v635 = vshll.u32 %v634, 16
    %v636 = vadd.s32 %v635, %v633
    %v637 = vsel %vm404, %v481, 2147483647
    %v638 = vand.u32 %v637, 65535
    %v639 = vshra.s32 %v637, 16
    %v640 = vcvt.s32.f32 %v638
    %v641 = vcvt.s32.f32 %v639
    %642 = vmin.xlane.f32.xlu0 %v641
    %v643 = vpop.xlane.xlu0 %642
    %vm644 = vcmp.eq.f32.partialorder %v641, %v643
    %v645 = vsel %vm644, %v640, inf
    %646 = vmin.xlane.f32.xlu0 %v645
    %v647 = vpop.xlane.xlu0 %646
    %v648 = vcvt.f32.s32 %v647
    %v649 = vcvt.f32.s32 %v643
    %v650 = vshll.u32 %v649, 16
    %v651 = vadd.s32 %v650, %v648
    %v652 = vsel %vm404, %v482, 2147483647
    %v653 = vand.u32 %v652, 65535
    %v654 = vshra.s32 %v652, 16
    %v655 = vcvt.s32.f32 %v653
    %v656 = vcvt.s32.f32 %v654
    %657 = vmin.xlane.f32.xlu0 %v656
    %v658 = vpop.xlane.xlu0 %657
    %vm659 = vcmp.eq.f32.partialorder %v656, %v658
    %v660 = vsel %vm659, %v655, inf
    %661 = vmin.xlane.f32.xlu0 %v660
    %v662 = vpop.xlane.xlu0 %661
    %v663 = vcvt.f32.s32 %v662
    %v664 = vcvt.f32.s32 %v658
    %v665 = vshll.u32 %v664, 16
    %v666 = vadd.s32 %v665, %v663
    %v667 = vsel %vm404, %v483, 2147483647
    %v668 = vand.u32 %v667, 65535
    %v669 = vshra.s32 %v667, 16
    %v670 = vcvt.s32.f32 %v668
    %v671 = vcvt.s32.f32 %v669
    %672 = vmin.xlane.f32.xlu0 %v671
    %v673 = vpop.xlane.xlu0 %672
    %vm674 = vcmp.eq.f32.partialorder %v671, %v673
    %v675 = vsel %vm674, %v670, inf
    %676 = vmin.xlane.f32.xlu0 %v675
    %v677 = vpop.xlane.xlu0 %676
    %v678 = vcvt.f32.s32 %v677
    %v679 = vcvt.f32.s32 %v673
    %v680 = vshll.u32 %v679, 16
    %v681 = vadd.s32 %v680, %v678
    %v682 = vsel %vm404, %v484, 2147483647
    %v683 = vand.u32 %v682, 65535
    %v684 = vshra.s32 %v682, 16
    %v685 = vcvt.s32.f32 %v683
    %v686 = vcvt.s32.f32 %v684
    %687 = vmin.xlane.f32.xlu0 %v686
    %v688 = vpop.xlane.xlu0 %687
    %vm689 = vcmp.eq.f32.partialorder %v686, %v688
    %v690 = vsel %vm689, %v685, inf
    %691 = vmin.xlane.f32.xlu0 %v690
    %v692 = vpop.xlane.xlu0 %691
    %v693 = vcvt.f32.s32 %v692
    %v694 = vcvt.f32.s32 %v688
    %v695 = vshll.u32 %v694, 16
    %v696 = vadd.s32 %v695, %v693
    %v697 = vsel %vm404, %v485, 2147483647
    %v698 = vand.u32 %v697, 65535
    %v699 = vshra.s32 %v697, 16
    %v700 = vcvt.s32.f32 %v698
    %v701 = vcvt.s32.f32 %v699
    %702 = vmin.xlane.f32.xlu0 %v701
    %v703 = vpop.xlane.xlu0 %702
    %vm704 = vcmp.eq.f32.partialorder %v701, %v703
    %v705 = vsel %vm704, %v700, inf
    %706 = vmin.xlane.f32.xlu0 %v705
    %v707 = vpop.xlane.xlu0 %706
    %v708 = vcvt.f32.s32 %v707
    %v709 = vcvt.f32.s32 %v703
    %v710 = vshll.u32 %v709, 16
    %v711 = vadd.s32 %v710, %v708
    %v712 = vsel %vm404, %v486, 2147483647
    %v713 = vand.u32 %v712, 65535
    %v714 = vshra.s32 %v712, 16
    %v715 = vcvt.s32.f32 %v713
    %v716 = vcvt.s32.f32 %v714
    %717 = vmin.xlane.f32.xlu0 %v716
    %v718 = vpop.xlane.xlu0 %717
    %vm719 = vcmp.eq.f32.partialorder %v716, %v718
    %v720 = vsel %vm719, %v715, inf
    %721 = vmin.xlane.f32.xlu0 %v720
    %v722 = vpop.xlane.xlu0 %721
    %v723 = vcvt.f32.s32 %v722
    %v724 = vcvt.f32.s32 %v718
    %v725 = vshll.u32 %v724, 16
    %v726 = vadd.s32 %v725, %v723
    %v727 = vlaneseq
    %v728 = vshrl.u32 %v727, 7
    %v729 = vsub.s32 %v454, %v728
    %v730 = vrot.slane %v501, %v729
    %v731 = vadd.s32 %v454, 4294967288
    %v732 = vlaneseq
    %v733 = vshrl.u32 %v732, 7
    %v734 = vsub.s32 %v731, %v733
    %v735 = vrot.slane %v516, %v734
    %vm736 = vcmask 130112
    %v737 = vsel %vm736, %v735, %v730
    %v738 = vadd.s32 %v454, 4294967280
    %v739 = vlaneseq
    %v740 = vshrl.u32 %v739, 7
    %v741 = vsub.s32 %v738, %v740
    %v742 = vrot.slane %v531, %v741
    %vm743 = vcmask 195712
    %v744 = vsel %vm743, %v742, %v737
    %v745 = vadd.s32 %v454, 4294967272
    %v746 = vlaneseq
    %v747 = vshrl.u32 %v746, 7
    %v748 = vsub.s32 %v745, %v747
    %v749 = vrot.slane %v546, %v748
    %vm750 = vcmask 261312
    %v751 = vsel %vm750, %v749, %v744
    %v752 = vadd.s32 %v454, 4294967264
    %v753 = vlaneseq
    %v754 = vshrl.u32 %v753, 7
    %v755 = vsub.s32 %v752, %v754
    %v756 = vrot.slane %v561, %v755
    %vm757 = vcmask 326912
    %v758 = vsel %vm757, %v756, %v751
    %v759 = vadd.s32 %v454, 4294967256
    %v760 = vlaneseq
    %v761 = vshrl.u32 %v760, 7
    %v762 = vsub.s32 %v759, %v761
    %v763 = vrot.slane %v576, %v762
    %vm764 = vcmask 392512
    %v765 = vsel %vm764, %v763, %v758
    %v766 = vadd.s32 %v454, 4294967248
    %v767 = vlaneseq
    %v768 = vshrl.u32 %v767, 7
    %v769 = vsub.s32 %v766, %v768
    %v770 = vrot.slane %v591, %v769
    %vm771 = vcmask 458112
    %v772 = vsel %vm771, %v770, %v765
    %v773 = vadd.s32 %v454, 4294967240
    %v774 = vlaneseq
    %v775 = vshrl.u32 %v774, 7
    %v776 = vsub.s32 %v773, %v775
    %v777 = vrot.slane %v606, %v776
    %vm778 = vcmask 523712
    %v779 = vsel %vm778, %v777, %v772
    %v780 = vadd.s32 %v454, 4294967232
    %v781 = vlaneseq
    %v782 = vshrl.u32 %v781, 7
    %v783 = vsub.s32 %v780, %v782
    %v784 = vrot.slane %v621, %v783
    %vm785 = vcmask 589312
    %v786 = vsel %vm785, %v784, %v779
    %v787 = vadd.s32 %v454, 4294967224
    %v788 = vlaneseq
    %v789 = vshrl.u32 %v788, 7
    %v790 = vsub.s32 %v787, %v789
    %v791 = vrot.slane %v636, %v790
    %vm792 = vcmask 654912
    %v793 = vsel %vm792, %v791, %v786
    %v794 = vadd.s32 %v454, 4294967216
    %v795 = vlaneseq
    %v796 = vshrl.u32 %v795, 7
    %v797 = vsub.s32 %v794, %v796
    %v798 = vrot.slane %v651, %v797
    %vm799 = vcmask 720512
    %v800 = vsel %vm799, %v798, %v793
    %v801 = vadd.s32 %v454, 4294967208
    %v802 = vlaneseq
    %v803 = vshrl.u32 %v802, 7
    %v804 = vsub.s32 %v801, %v803
    %v805 = vrot.slane %v666, %v804
    %vm806 = vcmask 786112
    %v807 = vsel %vm806, %v805, %v800
    %v808 = vadd.s32 %v454, 4294967200
    %v809 = vlaneseq
    %v810 = vshrl.u32 %v809, 7
    %v811 = vsub.s32 %v808, %v810
    %v812 = vrot.slane %v681, %v811
    %vm813 = vcmask 851712
    %v814 = vsel %vm813, %v812, %v807
    %v815 = vadd.s32 %v454, 4294967192
    %v816 = vlaneseq
    %v817 = vshrl.u32 %v816, 7
    %v818 = vsub.s32 %v815, %v817
    %v819 = vrot.slane %v696, %v818
    %vm820 = vcmask 917312
    %v821 = vsel %vm820, %v819, %v814
    %v822 = vadd.s32 %v454, 4294967184
    %v823 = vlaneseq
    %v824 = vshrl.u32 %v823, 7
    %v825 = vsub.s32 %v822, %v824
    %v826 = vrot.slane %v711, %v825
    %vm827 = vcmask 982912
    %v828 = vsel %vm827, %v826, %v821
    %v829 = vadd.s32 %v454, 4294967176
    %v830 = vlaneseq
    %v831 = vshrl.u32 %v830, 7
    %v832 = vsub.s32 %v829, %v831
    %v833 = vrot.slane %v726, %v832
    %vm834 = vcmask 1048512
    %v835 = vsel %vm834, %v833, %v828
    %836 = vst [vmem:[#allocation2] sm:$0x1] %v835
    %vm837 = vcmp.eq.s32.totalorder %v454, %v501
    %vm838 = vcmp.eq.s32.totalorder %v454, %v516
    %vm839 = vcmp.eq.s32.totalorder %v454, %v531
    %vm840 = vcmp.eq.s32.totalorder %v454, %v546
    %vm841 = vcmp.eq.s32.totalorder %v454, %v561
    %vm842 = vcmp.eq.s32.totalorder %v454, %v576
    %vm843 = vcmp.eq.s32.totalorder %v454, %v591
    %vm844 = vcmp.eq.s32.totalorder %v454, %v606
    %vm845 = vcmp.eq.s32.totalorder %v454, %v621
    %vm846 = vcmp.eq.s32.totalorder %v454, %v636
    %vm847 = vcmp.eq.s32.totalorder %v454, %v651
    %vm848 = vcmp.eq.s32.totalorder %v454, %v666
    %vm849 = vcmp.eq.s32.totalorder %v454, %v681
    %vm850 = vcmp.eq.s32.totalorder %v454, %v696
    %vm851 = vcmp.eq.s32.totalorder %v454, %v711
    %vm852 = vcmp.eq.s32.totalorder %v454, %v726
    %v853 = vsel %vm837, 1, 0
    %v854 = vsel %vm838, 1, 0
    %v855 = vsel %vm839, 1, 0
    %v856 = vsel %vm840, 1, 0
    %v857 = vsel %vm841, 1, 0
    %v858 = vsel %vm842, 1, 0
    %v859 = vsel %vm843, 1, 0
    %v860 = vsel %vm844, 1, 0
    %v861 = vsel %vm845, 1, 0
    %v862 = vsel %vm846, 1, 0
    %v863 = vsel %vm847, 1, 0
    %v864 = vsel %vm848, 1, 0
    %v865 = vsel %vm849, 1, 0
    %v866 = vsel %vm850, 1, 0
    %v867 = vsel %vm851, 1, 0
    %v868 = vsel %vm852, 1, 0
    %v869 = vcvt.s32.f32 %v853
    %v870 = vcvt.s32.f32 %v854
    %v871 = vcvt.s32.f32 %v855
    %v872 = vcvt.s32.f32 %v856
    %v873 = vcvt.s32.f32 %v857
    %v874 = vcvt.s32.f32 %v858
    %v875 = vcvt.s32.f32 %v859
    %v876 = vcvt.s32.f32 %v860
    %v877 = vcvt.s32.f32 %v861
    %v878 = vcvt.s32.f32 %v862
    %v879 = vcvt.s32.f32 %v863
    %v880 = vcvt.s32.f32 %v864
    %v881 = vcvt.s32.f32 %v865
    %v882 = vcvt.s32.f32 %v866
    %v883 = vcvt.s32.f32 %v867
    %v884 = vcvt.s32.f32 %v868
    %v885 = vld [vmem:[%s2] sm:$0xff]
    %v886 = vld [vmem:[%s2 + $0x8] sm:$0xff]
    %v887 = vld [vmem:[%s2 + $0x10] sm:$0xff]
    %v888 = vld [vmem:[%s2 + $0x18] sm:$0xff]
    %v889 = vld [vmem:[%s2 + $0x20] sm:$0xff]
    %v890 = vld [vmem:[%s2 + $0x28] sm:$0xff]
    %v891 = vld [vmem:[%s2 + $0x30] sm:$0xff]
    %v892 = vld [vmem:[%s2 + $0x38] sm:$0xff]
    %v894 = vsel %vm404, %v869, 0
    %v897 = vsel %vm404, %v870, 0
    %v900 = vsel %vm404, %v871, 0
    %v903 = vsel %vm404, %v872, 0
    %v906 = vsel %vm404, %v873, 0
    %v909 = vsel %vm404, %v874, 0
    %v912 = vsel %vm404, %v875, 0
    %v915 = vsel %vm404, %v876, 0
    %v918 = vsel %vm404, %v877, 0
    %v921 = vsel %vm404, %v878, 0
    %v924 = vsel %vm404, %v879, 0
    %v927 = vsel %vm404, %v880, 0
    %v930 = vsel %vm404, %v881, 0
    %v933 = vsel %vm404, %v882, 0
    %v936 = vsel %vm404, %v883, 0
    %v939 = vsel %vm404, %v884, 0
    %941 = vmatprep.subr.mxu0 0.0
    %942 = vmatpush1.msra.mxu0 0.0
    %943 = vmatprep.subr.mxu0 0.0
    %944 = vmatpush1.msra.mxu0 0.0
    %945 = vmatprep.subr.mxu0 0.0
    %946 = vmatpush1.msra.mxu0 0.0
    %947 = vmatprep.subr.mxu0 0.0
    %948 = vmatpush1.msra.mxu0 0.0
    %949 = vmatprep.subr.mxu0 0.0
    %950 = vmatpush1.msra.mxu0 0.0
    %951 = vmatprep.subr.mxu0 0.0
    %952 = vmatpush1.msra.mxu0 0.0
    %953 = vmatprep.subr.mxu0 0.0
    %954 = vmatpush1.msra.mxu0 0.0
    %955 = vmatprep.subr.mxu0 0.0
    %956 = vmatpush1.msra.mxu0 0.0
    %957 = vmatprep.subr.mxu0 0.0
    %958 = vmatpush1.msra.mxu0 %v892
    %959 = vmatprep.subr.mxu0 0.0
    %960 = vmatpush1.msra.mxu0 %v891
    %961 = vmatprep.subr.mxu0 0.0
    %962 = vmatpush1.msra.mxu0 %v890
    %963 = vmatprep.subr.mxu0 0.0
    %964 = vmatpush1.msra.mxu0 %v889
    %965 = vmatprep.subr.mxu0 0.0
    %966 = vmatpush1.msra.mxu0 %v888
    %967 = vmatprep.subr.mxu0 0.0
    %968 = vmatpush1.msra.mxu0 %v887
    %969 = vmatprep.subr.mxu0 0.0
    %970 = vmatpush1.msra.mxu0 %v886
    %971 = vmatprep.subr.mxu0 0.0
    %972 = vmatpush1.msra.mxu0 %v885
    %973 = vmatprep.subr.mxu0 0.0
    %974 = vmatpush2.msra.mxu0 0.0
    %975 = vmatprep.subr.mxu0 0.0
    %976 = vmatpush2.msra.mxu0 0.0
    %977 = vmatprep.subr.mxu0 0.0
    %978 = vmatpush2.msra.mxu0 0.0
    %979 = vmatprep.subr.mxu0 0.0
    %980 = vmatpush2.msra.mxu0 0.0
    %981 = vmatprep.subr.mxu0 0.0
    %982 = vmatpush2.msra.mxu0 0.0
    %983 = vmatprep.subr.mxu0 0.0
    %984 = vmatpush2.msra.mxu0 0.0
    %985 = vmatprep.subr.mxu0 0.0
    %986 = vmatpush2.msra.mxu0 0.0
    %987 = vmatprep.subr.mxu0 0.0
    %988 = vmatpush2.msra.mxu0 0.0
    %989 = vmatprep.subr.mxu0 0.0
    %990 = vmatpush2.msra.mxu0 0.0
    %991 = vmatprep.subr.mxu0 0.0
    %992 = vmatpush2.msra.mxu0 0.0
    %993 = vmatprep.subr.mxu0 0.0
    %994 = vmatpush2.msra.mxu0 0.0
    %995 = vmatprep.subr.mxu0 0.0
    %996 = vmatpush2.msra.mxu0 0.0
    %997 = vmatprep.subr.mxu0 0.0
    %998 = vmatpush2.msra.mxu0 0.0
    %999 = vmatprep.subr.mxu0 0.0
    %1000 = vmatpush2.msra.mxu0 0.0
    %1001 = vmatprep.subr.mxu0 0.0
    %1002 = vmatpush2.msra.mxu0 0.0
    %1003 = vmatprep.subr.mxu0 0.0
    %1004 = vmatpush2.msra.mxu0 0.0
    %1005 = vmatprep.mubr.f32.mxu0 0.0
    %1006 = vmatmul.mubr.f32.gmra.mxu0 %v894
    %v1007 = vpop.f32.mrf.mxu0
    %v1008 = vadd.f32 0.0, %v1007
    %v1009 = vpop.f32.mrf.mxu0
    %1010 = vmatprep.mubr.f32.mxu0 0.0
    %1011 = vmatmul.mubr.f32.gmra.mxu0 %v897
    %v1012 = vpop.f32.mrf.mxu0
    %v1013 = vadd.f32 0.0, %v1012
    %v1014 = vpop.f32.mrf.mxu0
    %1015 = vmatprep.mubr.f32.mxu0 0.0
    %1016 = vmatmul.mubr.f32.gmra.mxu0 %v900
    %v1017 = vpop.f32.mrf.mxu0
    %v1018 = vadd.f32 0.0, %v1017
    %v1019 = vpop.f32.mrf.mxu0
    %1020 = vmatprep.mubr.f32.mxu0 0.0
    %1021 = vmatmul.mubr.f32.gmra.mxu0 %v903
    %v1022 = vpop.f32.mrf.mxu0
    %v1023 = vadd.f32 0.0, %v1022
    %v1024 = vpop.f32.mrf.mxu0
    %1025 = vmatprep.mubr.f32.mxu0 0.0
    %1026 = vmatmul.mubr.f32.gmra.mxu0 %v906
    %v1027 = vpop.f32.mrf.mxu0
    %v1028 = vadd.f32 0.0, %v1027
    %v1029 = vpop.f32.mrf.mxu0
    %1030 = vmatprep.mubr.f32.mxu0 0.0
    %1031 = vmatmul.mubr.f32.gmra.mxu0 %v909
    %v1032 = vpop.f32.mrf.mxu0
    %v1033 = vadd.f32 0.0, %v1032
    %v1034 = vpop.f32.mrf.mxu0
    %1035 = vmatprep.mubr.f32.mxu0 0.0
    %1036 = vmatmul.mubr.f32.gmra.mxu0 %v912
    %v1037 = vpop.f32.mrf.mxu0
    %v1038 = vadd.f32 0.0, %v1037
    %v1039 = vpop.f32.mrf.mxu0
    %1040 = vmatprep.mubr.f32.mxu0 0.0
    %1041 = vmatmul.mubr.f32.gmra.mxu0 %v915
    %v1042 = vpop.f32.mrf.mxu0
    %v1043 = vadd.f32 0.0, %v1042
    %v1044 = vpop.f32.mrf.mxu0
    %1045 = vmatprep.mubr.f32.mxu0 0.0
    %1046 = vmatmul.mubr.f32.gmra.mxu0 %v918
    %v1047 = vpop.f32.mrf.mxu0
    %v1048 = vadd.f32 0.0, %v1047
    %v1049 = vpop.f32.mrf.mxu0
    %1050 = vmatprep.mubr.f32.mxu0 0.0
    %1051 = vmatmul.mubr.f32.gmra.mxu0 %v921
    %v1052 = vpop.f32.mrf.mxu0
    %v1053 = vadd.f32 0.0, %v1052
    %v1054 = vpop.f32.mrf.mxu0
    %1055 = vmatprep.mubr.f32.mxu0 0.0
    %1056 = vmatmul.mubr.f32.gmra.mxu0 %v924
    %v1057 = vpop.f32.mrf.mxu0
    %v1058 = vadd.f32 0.0, %v1057
    %v1059 = vpop.f32.mrf.mxu0
    %1060 = vmatprep.mubr.f32.mxu0 0.0
    %1061 = vmatmul.mubr.f32.gmra.mxu0 %v927
    %v1062 = vpop.f32.mrf.mxu0
    %v1063 = vadd.f32 0.0, %v1062
    %v1064 = vpop.f32.mrf.mxu0
    %1065 = vmatprep.mubr.f32.mxu0 0.0
    %1066 = vmatmul.mubr.f32.gmra.mxu0 %v930
    %v1067 = vpop.f32.mrf.mxu0
    %v1068 = vadd.f32 0.0, %v1067
    %v1069 = vpop.f32.mrf.mxu0
    %1070 = vmatprep.mubr.f32.mxu0 0.0
    %1071 = vmatmul.mubr.f32.gmra.mxu0 %v933
    %v1072 = vpop.f32.mrf.mxu0
    %v1073 = vadd.f32 0.0, %v1072
    %v1074 = vpop.f32.mrf.mxu0
    %1075 = vmatprep.mubr.f32.mxu0 0.0
    %1076 = vmatmul.mubr.f32.gmra.mxu0 %v936
    %v1077 = vpop.f32.mrf.mxu0
    %v1078 = vadd.f32 0.0, %v1077
    %v1079 = vpop.f32.mrf.mxu0
    %1080 = vmatprep.mubr.f32.mxu0 0.0
    %1081 = vmatmul.mubr.f32.gmra.mxu0 %v939
    %v1082 = vpop.f32.mrf.mxu0
    %v1083 = vadd.f32 0.0, %v1082
    %v1084 = vpop.f32.mrf.mxu0
    %1085 = vdwg.mxu0
    %1086 = vst.msk [vmem:[%s3] sm:$0xff] %vm50, %v1008
    %1087 = vst.msk [vmem:[%s3 + $0x8] sm:$0xff] %vm50, %v1013
    %1088 = vst.msk [vmem:[%s3 + $0x10] sm:$0xff] %vm50, %v1018
    %1089 = vst.msk [vmem:[%s3 + $0x18] sm:$0xff] %vm50, %v1023
    %1090 = vst.msk [vmem:[%s3 + $0x20] sm:$0xff] %vm50, %v1028
    %1091 = vst.msk [vmem:[%s3 + $0x28] sm:$0xff] %vm50, %v1033
    %1092 = vst.msk [vmem:[%s3 + $0x30] sm:$0xff] %vm50, %v1038
    %1093 = vst.msk [vmem:[%s3 + $0x38] sm:$0xff] %vm50, %v1043
    %1094 = vst.msk [vmem:[%s3 + $0x40] sm:$0xff] %vm50, %v1048
    %1095 = vst.msk [vmem:[%s3 + $0x48] sm:$0xff] %vm50, %v1053
    %1096 = vst.msk [vmem:[%s3 + $0x50] sm:$0xff] %vm50, %v1058
    %1097 = vst.msk [vmem:[%s3 + $0x58] sm:$0xff] %vm50, %v1063
    %1098 = vst.msk [vmem:[%s3 + $0x60] sm:$0xff] %vm50, %v1068
    %1099 = vst.msk [vmem:[%s3 + $0x68] sm:$0xff] %vm50, %v1073
    %1100 = vst.msk [vmem:[%s3 + $0x70] sm:$0xff] %vm50, %v1078
    %1101 = vst.msk [vmem:[%s3 + $0x78] sm:$0xff] %vm50, %v1083
    // Predicated region
    $region14: #{tpu_custom_call.1} parent=1 // pred_check
      _
    $region15: #{tpu_custom_call.1} parent=1 // pred_check_branch
      %1103 = sbr.rel (0) target = $region17
    $region16: #{tpu_custom_call.1} parent=1 // pred_region
      _
    $region17: #{tpu_custom_call.1} parent=1 // pred_fallthru
      _
    // Predicated region
    $region18: #{tpu_custom_call.1} parent=1 // pred_check
      _
    $region19: #{tpu_custom_call.1} parent=1 // pred_check_branch
      %1105 = sbr.rel (0) target = $region21
    $region20: #{tpu_custom_call.1} parent=1 // pred_region
      %s1107 = ssub.s32 16, 16
      %1108 = vsyncadd [#allocation3], %s1107
      %s1110 = sshll.u32 [#allocation2], 4
      %s1111 = int_to_ptr.vmem [resolvable:$true] %s1110
      %1113 = dma.vmem_to_hbm [thread:$0]  %s1111, 16, %s4, [#allocation3]
    $region21: #{tpu_custom_call.1} parent=1 // pred_fallthru
      _
    // Predicated region
    $region22: #{tpu_custom_call.1} parent=1 // pred_check
      _
    $region23: #{tpu_custom_call.1} parent=1 // pred_check_branch
      %1115 = sbr.rel (0) target = $region25
    $region24: #{tpu_custom_call.1} parent=1 // pred_region
      _
    $region25: #{tpu_custom_call.1} parent=1 // pred_fallthru
      _
    // Predicated region
    $region26: #{tpu_custom_call.1} parent=1 // pred_check
      _
    $region27: #{tpu_custom_call.1} parent=1 // pred_check_branch
      %1117 = sbr.rel (0) target = $region29
    $region28: #{tpu_custom_call.1} parent=1 // pred_region
      %1118 = dma.done [#allocation3], 16
    $region29: #{tpu_custom_call.1} parent=1 // pred_fallthru
      _
    %1119 = vsyncpa [#allocation3], 1

</llo_original>
